<compile_context>
chip_gen: v7x
topology: tpu7x:2x2x1
jax: 0.10.0
libtpu: 0.0.40
codegen_flags: <defaults>
</compile_context>

<pallas_src>
import jax
import jax.numpy as jnp
from jax.experimental import pallas as pl
from jax.experimental.pallas import tpu as pltpu

_NEG_BIG = -1e30  # "minus infinity" that stays NaN-free through exp/max


def _round_up(x, m):
    return ((x + m - 1) // m) * m


# ----------------------------------------------------------------------------
# Kernels
# ----------------------------------------------------------------------------
def _single_tile_kernel(x_ref, w_ref, b_ref, o_ref):
    """Whole vocab in one lane-dense tile: fused matmul + log_softmax."""
    logits = jnp.dot(x_ref[...], w_ref[...],
                     preferred_element_type=jnp.float32) + b_ref[...]
    m = jnp.max(logits, axis=-1, keepdims=True)
    lse = m + jnp.log(jnp.sum(jnp.exp(logits - m), axis=-1, keepdims=True))
    o_ref[...] = (logits - lse).astype(o_ref.dtype)


def _streaming_kernel(x_ref, w_ref, b_ref, o_ref, m_ref, l_ref, acc_ref):
    """One (row-tile i, vocab-tile j) grid step.

    x_ref:   (tm, D)       activation row tile (resident across the vocab axis)
    w_ref:   (D, tn)       weight vocab tile (streams from HBM)
    b_ref:   (1, tn)       bias tile (f32, padded cols = -1e30)
    o_ref:   (tm, V_pad)   output block, resident across the vocab axis
    m_ref:   (tm, 1) f32   running row max
    l_ref:   (tm, 1) f32   running row sum of exp(logit - max)
    acc_ref: (tm, V_pad)   f32 raw logits, resident across the vocab axis
    """
    j = pl.program_id(1)
    nj = pl.num_programs(1)
    tn = w_ref.shape[1]

    @pl.when(j == 0)
    def _init():
        m_ref[...] = jnp.full_like(m_ref, _NEG_BIG)
        l_ref[...] = jnp.zeros_like(l_ref)

    # MXU matmul: storage dtype inputs (bf16 fast path), f32 accumulation.
    logits = jnp.dot(x_ref[...], w_ref[...],
                     preferred_element_type=jnp.float32) + b_ref[...]

    # Online logsumexp update (XLU/EUP work, overlaps with the next MXU tile).
    m_prev = m_ref[...]
    m_new = jnp.maximum(m_prev, jnp.max(logits, axis=-1, keepdims=True))
    l_ref[...] = (l_ref[...] * jnp.exp(m_prev - m_new)
                  + jnp.sum(jnp.exp(logits - m_new), axis=-1, keepdims=True))
    m_ref[...] = m_new

    # Stash raw f32 logits; lse is only known after the last vocab tile.
    off = pl.multiple_of(j * tn, tn)
    acc_ref[:, pl.ds(off, tn)] = logits

    @pl.when(j == nj - 1)
    def _finalize():
        lse = m_ref[...] + jnp.log(l_ref[...])
        # Single lane-dense write of the whole row block.
        o_ref[...] = (acc_ref[...] - lse).astype(o_ref.dtype)


# ----------------------------------------------------------------------------
# Wrapper
# ----------------------------------------------------------------------------
def output_layer(x, weight_t, bias, *, tm=None, tn=None, out_dtype=None):
    """log_softmax(x @ weight_t + bias, axis=-1).

    x:        [B, S, d_model]   (bf16 recommended for the MXU fast path)
    weight_t: [d_model, vocab]  (transposed nn.Linear weight)
    bias:     [vocab]
    """
    B, S, D = x.shape
    V = weight_t.shape[1]
    M = B * S
    out_dtype = jnp.dtype(out_dtype if out_dtype is not None else x.dtype)

    # ---- tile selection -----------------------------------------------------
    if tn is None:
        tn = 512                                   # multiple of 128
    tn = min(_round_up(tn, 128), _round_up(V, 128))
    V_pad = _round_up(V, tn)
    num_v_tiles = V_pad // tn

    if tm is None:
        tm = min(256, _round_up(M, 8))             # fill MXU, amortize step cost
    tm = max(8, _round_up(tm, 8))
    # Keep per-row resident state (f32 logits scratch + output block) within a
    # VMEM budget so weight tiles still double-buffer (v7x: 64 MiB VMEM/TC).
    resident_per_row = V_pad * (4 + out_dtype.itemsize)
    budget = 24 * 1024 * 1024
    while tm > 8 and tm * resident_per_row > budget:
        tm = max(8, _round_up(tm // 2, 8))
    # TODO(synk): for very large vocabularies (still over budget at tm=8) switch
    # to a two-pass / recompute schedule instead of the resident logits scratch.

    M_pad = _round_up(M, tm)

    # ---- pad operands to the tile grid ---------------------------------------
    x2 = x.reshape(M, D)
    if M_pad != M:
        x2 = jnp.pad(x2, ((0, M_pad - M), (0, 0)))
    w = weight_t
    b = bias.astype(jnp.float32).reshape(1, V)
    if V_pad != V:
        w = jnp.pad(w, ((0, 0), (0, V_pad - V)))
        # Padded vocab columns get a huge negative bias so they contribute 0
        # to the logsumexp; they are sliced off below.
        b = jnp.pad(b, ((0, 0), (0, V_pad - V)), constant_values=_NEG_BIG)

    # ---- scheduler hints -------------------------------------------------------
    est_vmem = (2 * tm * D * x2.dtype.itemsize        # activation tile
                + 2 * D * tn * w.dtype.itemsize       # weight tile (dbl-buf)
                + 2 * tn * 4                          # bias tile
                + tm * V_pad * 4                      # f32 logits scratch
                + tm * V_pad * out_dtype.itemsize     # resident output block
                + 2 * tm * 128 * 4)                   # m/l scratch (lane-padded)
    vmem_limit = int(min(max(2 * est_vmem, 16 * 1024 * 1024), 64 * 1024 * 1024))

    cost = pl.CostEstimate(
        flops=2 * M * D * V,
        transcendentals=M * V,                        # exp in logsumexp
        bytes_accessed=(x2.size * x2.dtype.itemsize
                        + w.size * w.dtype.itemsize
                        + b.size * 4
                        + M_pad * V_pad * out_dtype.itemsize),
    )

    if num_v_tiles == 1:
        # Whole vocab fits one lane-dense tile: fused single-pass kernel.
        out = pl.pallas_call(
            _single_tile_kernel,
            out_shape=jax.ShapeDtypeStruct((M_pad, V_pad), out_dtype),
            grid=(M_pad // tm,),
            in_specs=[
                pl.BlockSpec((tm, D), lambda i: (i, 0)),
                pl.BlockSpec((D, V_pad), lambda i: (0, 0)),
                pl.BlockSpec((1, V_pad), lambda i: (0, 0)),
            ],
            out_specs=pl.BlockSpec((tm, V_pad), lambda i: (i, 0)),
            compiler_params=pltpu.CompilerParams(
                dimension_semantics=("parallel",),
                vmem_limit_bytes=vmem_limit,
            ),
            cost_estimate=cost,
        )(x2, w, b)
    else:
        out = pl.pallas_call(
            _streaming_kernel,
            out_shape=jax.ShapeDtypeStruct((M_pad, V_pad), out_dtype),
            grid=(M_pad // tm, num_v_tiles),
            in_specs=[
                pl.BlockSpec((tm, D), lambda i, j: (i, 0)),   # row tile (resident)
                pl.BlockSpec((D, tn), lambda i, j: (0, j)),   # streamed weight tile
                pl.BlockSpec((1, tn), lambda i, j: (0, j)),   # bias tile
            ],
            # Output row-block stays resident in VMEM across the vocab axis and
            # is written back once per row tile (lane-dense, multiple of 128).
            out_specs=pl.BlockSpec((tm, V_pad), lambda i, j: (i, 0)),
            scratch_shapes=[
                pltpu.VMEM((tm, 1), jnp.float32),             # running max
                pltpu.VMEM((tm, 1), jnp.float32),             # running sum-exp
                pltpu.VMEM((tm, V_pad), jnp.float32),         # raw f32 logits
            ],
            compiler_params=pltpu.CompilerParams(
                dimension_semantics=("parallel", "arbitrary"),  # vocab = reduction
                vmem_limit_bytes=vmem_limit,
            ),
            cost_estimate=cost,
        )(x2, w, b)

    return out[:M, :V].reshape(B, S, V)


def reference(x, weight_t, bias):
    logits = jnp.einsum("bsd,dv->bsv", x, weight_t,
                        preferred_element_type=jnp.float32) + bias
    return jax.nn.log_softmax(logits, axis=-1)


if __name__ == "__main__":
    key = jax.random.PRNGKey(0)
    kx, kw, kb, kx2, kw2, kb2 = jax.random.split(key, 6)

    # ---- case 1: nominal small shape (single vocab tile path) ---------------
    d_model, vocab_size = 32, 128
    batch, seq = 2, 8
    bound = 1.0 / (d_model ** 0.5)
    weight = jax.random.uniform(kw, (vocab_size, d_model), minval=-bound,
                                maxval=bound, dtype=jnp.float32)  # PyTorch layout
    bias = jax.random.uniform(kb, (vocab_size,), minval=-bound,
                              maxval=bound, dtype=jnp.float32)
    x = jax.random.normal(kx, (batch, seq, d_model), dtype=jnp.float32)

    x_bf = x.astype(jnp.bfloat16)
    w_bf = weight.T.astype(jnp.bfloat16)              # [d_model, vocab]

    out = output_layer(x_bf, w_bf, bias, out_dtype=jnp.float32)
    out = jax.block_until_ready(out)
    ref = reference(x_bf, w_bf, bias)
    assert out.shape == (batch, seq, vocab_size)
    assert jnp.allclose(out, ref, atol=1e-4, rtol=1e-4), "case1 mismatch vs reference"

    # ---- case 2: ragged shapes exercising padding + streaming online lse ----
    d_model2, vocab2 = 32, 300                        # vocab padded to 384 (3 tiles)
    batch2, seq2 = 3, 5                               # 15 rows -> padded to 16
    bound2 = 1.0 / (d_model2 ** 0.5)
    weight2 = jax.random.uniform(kw2, (vocab2, d_model2), minval=-bound2,
                                 maxval=bound2, dtype=jnp.float32)
    bias2 = jax.random.uniform(kb2, (vocab2,), minval=-bound2,
                               maxval=bound2, dtype=jnp.float32)
    xx = jax.random.normal(kx2, (batch2, seq2, d_model2), dtype=jnp.float32)
    xx_bf = xx.astype(jnp.bfloat16)
    w2_bf = weight2.T.astype(jnp.bfloat16)

    out2 = output_layer(xx_bf, w2_bf, bias2, tn=128, out_dtype=jnp.float32)
    out2 = jax.block_until_ready(out2)
    ref2 = reference(xx_bf, w2_bf, bias2)
    assert out2.shape == (batch2, seq2, vocab2)
    assert jnp.allclose(out2, ref2, atol=1e-4, rtol=1e-4), "case2 mismatch vs reference"

    print("KERNEL_OK")
</pallas_src>

<mosaic_0001>
module attributes {stable_mosaic.version = 11 : i64} {
  func.func @_single_tile_kernel(%arg0: i32, %arg1: memref<16x32xbf16, #tpu.memory_space<vmem>>, %arg2: memref<32x128xbf16, #tpu.memory_space<vmem>>, %arg3: memref<1x128xf32, #tpu.memory_space<vmem>>, %arg4: memref<16x128xf32, #tpu.memory_space<vmem>>) attributes {dimension_semantics = [#tpu.dimension_semantics<parallel>], iteration_bounds = array<i64: 1>, scalar_prefetch = 0 : i64, scratch_operands = 0 : i64, tpu.core_type = #tpu.core_type<tc>, window_params = [{transform_indices = @transform_0, window_bounds = array<i64: 16, 32>}, {pipeline_mode = #tpu.pipeline_mode<synchronous>, transform_indices = @transform_1, window_bounds = array<i64: 32, 128>}, {pipeline_mode = #tpu.pipeline_mode<synchronous>, transform_indices = @transform_2, window_bounds = array<i64: 1, 128>}, {transform_indices = @transform_3, window_bounds = array<i64: 16, 128>}]} {
    %c0 = arith.constant 0 : index
    %c0_0 = arith.constant 0 : index
    %0 = vector.load %arg1[%c0, %c0_0] : memref<16x32xbf16, #tpu.memory_space<vmem>>, vector<16x32xbf16>
    %c0_1 = arith.constant 0 : index
    %c0_2 = arith.constant 0 : index
    %1 = vector.load %arg2[%c0_1, %c0_2] : memref<32x128xbf16, #tpu.memory_space<vmem>>, vector<32x128xbf16>
    %cst = arith.constant dense<0.000000e+00> : vector<16x128xf32>
    %2 = tpu.matmul %0, %1, %cst {dimension_numbers = #tpu.dot_dimension_numbers<[1], [0], [0], [1], [0, 0, 1, 1], [], []>} : vector<16x32xbf16>, vector<32x128xbf16>, vector<16x128xf32> -> vector<16x128xf32>
    %c0_3 = arith.constant 0 : index
    %c0_4 = arith.constant 0 : index
    %3 = vector.load %arg3[%c0_3, %c0_4] : memref<1x128xf32, #tpu.memory_space<vmem>>, vector<1x128xf32>
    %4 = vector.broadcast %3 : vector<1x128xf32> to vector<16x128xf32>
    %5 = arith.addf %2, %4 : vector<16x128xf32>
    %cst_5 = arith.constant dense<0xFF800000> : vector<16xf32>
    %6 = vector.multi_reduction <maximumf>, %5, %cst_5 [1] : vector<16x128xf32> to vector<16xf32>
    %7 = vector.shape_cast %6 : vector<16xf32> to vector<16x1xf32>
    %8 = vector.broadcast %7 : vector<16x1xf32> to vector<16x128xf32>
    %9 = arith.subf %5, %8 : vector<16x128xf32>
    %10 = math.exp %9 : vector<16x128xf32>
    %cst_6 = arith.constant dense<0.000000e+00> : vector<16xf32>
    %11 = vector.multi_reduction <add>, %10, %cst_6 [1] : vector<16x128xf32> to vector<16xf32>
    %12 = vector.shape_cast %11 : vector<16xf32> to vector<16x1xf32>
    %13 = math.log %12 : vector<16x1xf32>
    %14 = arith.addf %7, %13 : vector<16x1xf32>
    %15 = vector.broadcast %14 : vector<16x1xf32> to vector<16x128xf32>
    %16 = arith.subf %5, %15 : vector<16x128xf32>
    %c0_7 = arith.constant 0 : index
    %c0_8 = arith.constant 0 : index
    %17 = vector.load %arg4[%c0_7, %c0_8] : memref<16x128xf32, #tpu.memory_space<vmem>>, vector<16x128xf32>
    tpu.vector_store %arg4[%c0_7, %c0_8], %16 {strides = array<i32>} : memref<16x128xf32, #tpu.memory_space<vmem>>, vector<16x128xf32>,
    return
  }
  func.func @transform_0(%arg0: i32) -> (i32, i32) {
    %c0_i32 = arith.constant 0 : i32
    %c0_i32_0 = arith.constant 0 : i32
    return %arg0, %c0_i32 : i32, i32
  }
  func.func @transform_1(%arg0: i32) -> (i32, i32) {
    %c0_i32 = arith.constant 0 : i32
    %c0_i32_0 = arith.constant 0 : i32
    %c0_i32_1 = arith.constant 0 : i32
    return %c0_i32, %c0_i32_0 : i32, i32
  }
  func.func @transform_2(%arg0: i32) -> (i32, i32) {
    %c0_i32 = arith.constant 0 : i32
    %c0_i32_0 = arith.constant 0 : i32
    %c0_i32_1 = arith.constant 0 : i32
    return %c0_i32, %c0_i32_0 : i32, i32
  }
  func.func @transform_3(%arg0: i32) -> (i32, i32) {
    %c0_i32 = arith.constant 0 : i32
    %c0_i32_0 = arith.constant 0 : i32
    return %arg0, %c0_i32 : i32, i32
  }
}

</mosaic_0001>

<llo_original>
// kernel: tpu_custom_call.1
$region0: #{tpu_custom_call.1}
  #allocation0 [shape = 'u32[]', space=smem, size = 0x4, offset = 0x4, fixed_abs, tag = 'smem constant byte address 0x4 - core index']
  #allocation1 [shape = 'u32[144,128]{1,0:T(1,128)}', space=vmem, size = 0x12000, scoped, tag = 'internal scratch']
  %s0 = inlined_call_operand.hbm [shape: bf16[16,32], index: 0, kind: input, shape index: {}]
  %s1 = inlined_call_operand.hbm [shape: bf16[32,128], index: 1, kind: input, shape index: {}]
  %s2 = inlined_call_operand.vmem [shape: f32[1,128], index: 2, kind: input, shape index: {}]
  %s3 = inlined_call_operand.hbm [shape: f32[16,128], index: 3, kind: output, shape index: {}]
  %s4 = sld [smem:[#allocation0]]
  $region30: #{tpu_custom_call.1} parent=0
    _
  %s6 = ssub.s32 1, %s4
  %s7 = scalar_select 0, %s6, %s4
  $region1: #{tpu_custom_call.1} parent=0
    #allocation2 [shape = 'u8[4096]{0}', space=vmem, size = 0x1000, scoped, tag = 'input window, operand 0, single buffered']
    #allocation3 [shape = 's32[1]{0}', space=sflag, size = 0x4, scoped, tag = 'scoped memory for tpu_custom_call.1']
    #allocation4 [shape = 's32[1]{0}', space=sflag, size = 0x4, scoped, tag = 'scoped memory for tpu_custom_call.1']
    #allocation5 [shape = 'u8[8192]{0}', space=vmem, size = 0x2000, scoped, tag = 'input window, operand 1, single buffered']
    #allocation6 [shape = 's32[1]{0}', space=sflag, size = 0x4, scoped, tag = 'scoped memory for tpu_custom_call.1']
    #allocation7 [shape = 'u8[8192]{0}', space=vmem, size = 0x2000, scoped, tag = 'output window, operand 0, single buffered']
    %8 = vsyncpa [#allocation3], 0
    %9 = vsyncpa [#allocation6], 0
    %10 = vsyncpa [#allocation4], 0
    // Predicated region
    $region2: #{tpu_custom_call.1} parent=1 // pred_check
      _
    $region3: #{tpu_custom_call.1} parent=1 // pred_check_branch
      %12 = sbr.rel (0) target = $region5
    $region4: #{tpu_custom_call.1} parent=1 // pred_region
      %s14 = ssub.s32 128, 128
      %15 = vsyncadd [#allocation3], %s14
      %s16 = sshll.u32 [#allocation2], 4
      %s17 = int_to_ptr.vmem [resolvable:$true] %s16
      %22 = dma.hbm_to_vmem [thread:$0]  %s0, 128, %s17, [#allocation3], 64, 64, 4
    $region5: #{tpu_custom_call.1} parent=1 // pred_fallthru
      _
    // Predicated region
    $region6: #{tpu_custom_call.1} parent=1 // pred_check
      _
    $region7: #{tpu_custom_call.1} parent=1 // pred_check_branch
      %24 = sbr.rel (0) target = $region9
    $region8: #{tpu_custom_call.1} parent=1 // pred_region
      %s26 = ssub.s32 256, 256
      %27 = vsyncadd [#allocation6], %s26
      %s28 = sshll.u32 [#allocation5], 4
      %s29 = int_to_ptr.vmem [resolvable:$true] %s28
      %34 = dma.hbm_to_vmem [thread:$0]  %s1, 256, %s29, [#allocation6], 64, 64, 4
    $region9: #{tpu_custom_call.1} parent=1 // pred_fallthru
      _
    // Predicated region
    $region10: #{tpu_custom_call.1} parent=1 // pred_check
      _
    $region11: #{tpu_custom_call.1} parent=1 // pred_check_branch
      %36 = sbr.rel (0) target = $region13
    $region12: #{tpu_custom_call.1} parent=1 // pred_region
      _
    $region13: #{tpu_custom_call.1} parent=1 // pred_fallthru
      _
    // Predicated region
    $region14: #{tpu_custom_call.1} parent=1 // pred_check
      _
    $region15: #{tpu_custom_call.1} parent=1 // pred_check_branch
      %38 = sbr.rel (0) target = $region17
    $region16: #{tpu_custom_call.1} parent=1 // pred_region
      %39 = dma.done [#allocation3], 128
    $region17: #{tpu_custom_call.1} parent=1 // pred_fallthru
      _
    // Predicated region
    $region18: #{tpu_custom_call.1} parent=1 // pred_check
      _
    $region19: #{tpu_custom_call.1} parent=1 // pred_check_branch
      %41 = sbr.rel (0) target = $region21
    $region20: #{tpu_custom_call.1} parent=1 // pred_region
      %42 = dma.done [#allocation6], 256
    $region21: #{tpu_custom_call.1} parent=1 // pred_fallthru
      _
    %v44 = vld [vmem:[#allocation2] sm:$0xf]
    %v45 = vld [vmem:[#allocation2 + $0x4] sm:$0xf]
    %v46 = vld [vmem:[#allocation5] sm:$0xf]
    %v47 = vld [vmem:[#allocation5 + $0x4] sm:$0xf]
    %v48 = vld [vmem:[#allocation5 + $0x8] sm:$0xf]
    %v49 = vld [vmem:[#allocation5 + $0xc] sm:$0xf]
    %v50 = vld [vmem:[%s2] sm:$0x1]
    %v52 = vlaneseq
    %v53 = vshrl.u32 %v52, 7
    %v54 = vsub.s32 0, %v53
    %v55 = vrot.slane %v50, %v54
    %v59 = vunpack.c.l.b16 %v44
    %v60 = vunpack.c.l.b16 %v45
    %v61 = vpack.c.b16 %v60, %v59
    %v66 = vunpack.c.l.b16 %v46
    %v67 = vunpack.c.l.b16 %v47
    %v68 = vunpack.c.l.b16 %v48
    %v69 = vunpack.c.l.b16 %v49
    %v70 = vpack.c.b16 %v67, %v66
    %v71 = vpack.c.b16 %v69, %v68
    %vm74 = vcmask 261120
    %v76 = vsel %vm74, %v61, 0
    %78 = vmatprep.subr.bf16.mxu0 0
    %79 = vmatpush1.bf16.msra.mxu0 %v70
    %80 = vmatprep.subr.bf16.mxu0 0
    %81 = vmatpush1.bf16.msra.mxu0 %v71
    %82 = vmatprep.subr.bf16.mxu0 0
    %83 = vmatpush1.bf16.msra.mxu0 0
    %84 = vmatprep.subr.bf16.mxu0 0
    %85 = vmatpush1.bf16.msra.mxu0 0
    %86 = vmatprep.subr.bf16.mxu0 0
    %87 = vmatpush1.bf16.msra.mxu0 0
    %88 = vmatprep.subr.bf16.mxu0 0
    %89 = vmatpush1.bf16.msra.mxu0 0
    %90 = vmatprep.subr.bf16.mxu0 0
    %91 = vmatpush1.bf16.msra.mxu0 0
    %92 = vmatprep.subr.bf16.mxu0 0
    %93 = vmatpush1.bf16.msra.mxu0 0
    %94 = vmatprep.subr.bf16.mxu0 0
    %95 = vmatpush1.bf16.msra.mxu0 0
    %96 = vmatprep.subr.bf16.mxu0 0
    %97 = vmatpush1.bf16.msra.mxu0 0
    %98 = vmatprep.subr.bf16.mxu0 0
    %99 = vmatpush1.bf16.msra.mxu0 0
    %100 = vmatprep.subr.bf16.mxu0 0
    %101 = vmatpush1.bf16.msra.mxu0 0
    %102 = vmatprep.subr.bf16.mxu0 0
    %103 = vmatpush1.bf16.msra.mxu0 0
    %104 = vmatprep.subr.bf16.mxu0 0
    %105 = vmatpush1.bf16.msra.mxu0 0
    %106 = vmatprep.subr.bf16.mxu0 0
    %107 = vmatpush1.bf16.msra.mxu0 0
    %108 = vmatprep.subr.bf16.mxu0 0
    %109 = vmatpush1.bf16.msra.mxu0 0
    %110 = vmatprep.mubr.bf16.mxu0 0
    %111 = vmatmul.mubr.bf16.gmra.mrb[0].mxu0 %v76
    %v112 = vpop.f32.mrb[0].mxu0
    %v113 = vadd.f32 %v55, %v112
    %v114 = vpop.f32.mrb[0].mxu0
    %v115 = vpop.f32.mrb[0].mxu0
    %v116 = vadd.f32 %v55, %v115
    %v117 = vpop.f32.mrb[0].mxu0
    %118 = vdwg.mxu0
    %119 = vmax.xlane.f32.xlu0 %v113
    %v120 = vpop.xlane.xlu0 %119
    %121 = vmax.xlane.f32.xlu0 %v116
    %v122 = vpop.xlane.xlu0 %121
    %v123 = vsub.f32 %v113, %v120
    %v124 = vsub.f32 %v116, %v122
    %v125 = vmul.f32 %v123, 1.442695
    %v126 = vpow.pop %v125
    %v127 = vmul.f32 %v124, 1.442695
    %v128 = vpow.pop %v127
    %129 = vadd.xlane.f32.xlu0 %v126
    %v130 = vpop.xlane.xlu0 %129
    %131 = vadd.xlane.f32.xlu0 %v128
    %v132 = vpop.xlane.xlu0 %131
    %v133 = vlog2.pop %v130
    %v134 = vmul.f32 %v133, 0.6931472
    %v135 = vlog2.pop %v132
    %v136 = vmul.f32 %v135, 0.6931472
    %v137 = vadd.f32 %v120, %v134
    %v138 = vadd.f32 %v122, %v136
    %v139 = vsub.f32 %v113, %v137
    %v140 = vsub.f32 %v116, %v138
    %141 = vst [vmem:[#allocation7] sm:$0xff] %v139
    %142 = vst [vmem:[#allocation7 + $0x8] sm:$0xff] %v140
    // Predicated region
    $region22: #{tpu_custom_call.1} parent=1 // pred_check
      _
    $region23: #{tpu_custom_call.1} parent=1 // pred_check_branch
      %144 = sbr.rel (0) target = $region25
    $region24: #{tpu_custom_call.1} parent=1 // pred_region
      %s146 = ssub.s32 256, 256
      %147 = vsyncadd [#allocation4], %s146
      %s148 = sshll.u32 [#allocation7], 4
      %s149 = int_to_ptr.vmem [resolvable:$true] %s148
      %154 = dma.vmem_to_hbm [thread:$0]  %s149, 256, %s3, [#allocation4], 128, 128, 8
    $region25: #{tpu_custom_call.1} parent=1 // pred_fallthru
      _
    // Predicated region
    $region26: #{tpu_custom_call.1} parent=1 // pred_check
      _
    $region27: #{tpu_custom_call.1} parent=1 // pred_check_branch
      %156 = sbr.rel (0) target = $region29
    $region28: #{tpu_custom_call.1} parent=1 // pred_region
      %157 = dma.done [#allocation4], 256
    $region29: #{tpu_custom_call.1} parent=1 // pred_fallthru
      _
    %158 = vsyncpa [#allocation3], 1
    %159 = vsyncpa [#allocation6], 1
    %160 = vsyncpa [#allocation4], 1

</llo_original>
